<compile_context>
chip_gen: v5e
topology: v5e:2x2
jax: 0.10.0
libtpu: 0.0.40
codegen_flags: <defaults>
</compile_context>

<pallas_src>
import functools

import jax
import jax.numpy as jnp
from jax.experimental import pallas as pl
from jax.experimental.pallas import tpu as pltpu


# ---------------------------------------------------------------------------
# Fused DnCNN kernel body: one (image n, layer l) pair per grid step.
# ---------------------------------------------------------------------------
def _dncnn_kernel(x_ref, w_ref, b_ref, m_ref, o_ref, buf_ref, *, wp):
    # x_ref  : (feat, P)      bf16  staged initial buffer for image n (zero halo baked in)
    # w_ref  : (9*feat, feat) bf16  layer-l weights, taps stacked along rows (t = 3*dy+dx)
    # b_ref  : (feat, 1)      f32   folded-BN bias for layer l
    # m_ref  : (1, P)         f32   0/1 mask of valid interior positions
    # o_ref  : (feat, P)      f32   last-layer output slab (lane-dense)
    # buf_ref: (feat, P)      bf16  persistent VMEM activation buffer
    feat, p = buf_ref.shape
    l = pl.program_id(1)
    n_layers = pl.num_programs(1)

    # New image: (re)load the staged input; halo / pad lanes arrive already zeroed.
    @pl.when(l == 0)
    def _():
        buf_ref[...] = x_ref[...]

    a = buf_ref[...]                                            # (feat, P) bf16
    acc = jnp.zeros((feat, p), jnp.float32)
    for dy in range(3):
        # Fat MXU matmul: 3 taps at once -> M = 3*feat, K = feat, N = P (lane-dense).
        s = jnp.dot(w_ref[(3 * dy) * feat:(3 * dy + 3) * feat, :], a,
                    preferred_element_type=jnp.float32)          # (3*feat, P) f32
        for dx in range(3):
            off = (dy - 1) * wp + (dx - 1)      # flattened spatial offset of this tap
            chunk = s[dx * feat:(dx + 1) * feat, :]              # aligned sublane slice
            if off != 0:
                # contribution[q] = chunk[q + off]  (XLU lane rotation, overlaps MXU)
                chunk = pltpu.roll(chunk, shift=(-off) % p, axis=1)
            acc = acc + chunk
    acc = acc + b_ref[...]                       # (feat, 1) broadcast over lanes

    @pl.when(l < n_layers - 1)
    def _():
        # ReLU, re-zero halo/pad lanes via the 0/1 mask, store the next activation.
        buf_ref[...] = (jnp.maximum(acc, 0.0) * m_ref[...]).astype(buf_ref.dtype)

    @pl.when(l == n_layers - 1)
    def _():
        o_ref[...] = acc                         # full slab; wrapper slices valid part


def dncnn_fused(x_buf, w_stack, b_stack, mask, wp):
    """x_buf: (N, feat, P) bf16 staged buffers -> (N, feat, P) f32 last-layer slab."""
    n, feat, p = x_buf.shape
    n_layers = w_stack.shape[0]

    kern = functools.partial(_dncnn_kernel, wp=wp)
    return pl.pallas_call(
        kern,
        out_shape=jax.ShapeDtypeStruct((n, feat, p), jnp.float32),
        grid_spec=pltpu.PrefetchScalarGridSpec(
            num_scalar_prefetch=0,
            grid=(n, n_layers),                      # layer (reduction-like) axis last
            in_specs=[
                pl.BlockSpec((pl.Squeezed(), feat, p), lambda n_, l: (n_, 0, 0)),
                pl.BlockSpec((pl.Squeezed(), 9 * feat, feat), lambda n_, l: (l, 0, 0)),
                pl.BlockSpec((pl.Squeezed(), feat, 1), lambda n_, l: (l, 0, 0)),
                pl.BlockSpec((1, p), lambda n_, l: (0, 0)),
            ],
            out_specs=pl.BlockSpec((pl.Squeezed(), feat, p), lambda n_, l: (n_, 0, 0)),
            scratch_shapes=[pltpu.VMEM((feat, p), jnp.bfloat16)],
        ),
        # vmem_limit_bytes not needed at these tile sizes (per-step footprint ~0.3 MB).
        compiler_params=pltpu.CompilerParams(
            dimension_semantics=("parallel", "arbitrary")),
    )(x_buf, w_stack, b_stack, mask)


# ---------------------------------------------------------------------------
# Parameters: deterministic init matching FFDNet(is_gray) layer shapes.
# BatchNorm (eval mode, default init) is folded into the weights/bias.
# Weight layout per layer: (9*feat, feat) with row = (3*dy+dx)*feat + c_out, col = c_in.
# ---------------------------------------------------------------------------
def init_ffdnet_params(key, is_gray=True):
    if is_gray:
        n_layers, in_ch, feat, out_ch = 15, 5, 64, 4
    else:
        n_layers, in_ch, feat, out_ch = 12, 15, 96, 12
    eps = 1e-5

    w_list, b_list = [], []
    for li in range(n_layers):
        cin = in_ch if li == 0 else feat
        cout = out_ch if li == n_layers - 1 else feat
        key, sub = jax.random.split(key)
        std = (2.0 / (9.0 * cin)) ** 0.5
        w = jax.random.normal(sub, (3, 3, cin, cout), jnp.float32) * std      # HWIO
        if 0 < li < n_layers - 1:
            # BatchNorm2d default init, eval mode: gamma=1, beta=0, mean=0, var=1
            gamma = jnp.ones((cout,), jnp.float32)
            beta = jnp.zeros((cout,), jnp.float32)
            r_mean = jnp.zeros((cout,), jnp.float32)
            r_var = jnp.ones((cout,), jnp.float32)
            scale = gamma / jnp.sqrt(r_var + eps)
            bias = beta - r_mean * scale
        else:
            scale = jnp.ones((cout,), jnp.float32)
            bias = jnp.zeros((cout,), jnp.float32)
        w = w * scale[None, None, None, :]                 # fold BN scale into weights
        w_full = jnp.zeros((3, 3, feat, feat), jnp.float32).at[:, :, :cin, :cout].set(w)
        # (dy, dx, ci, co) -> rows (t = 3*dy+dx, co), cols ci
        w_flat = jnp.transpose(w_full, (0, 1, 3, 2)).reshape(9 * feat, feat)
        b_full = jnp.zeros((feat,), jnp.float32).at[:cout].set(bias)
        w_list.append(w_flat)
        b_list.append(b_full.reshape(feat, 1))

    w_stack = jnp.stack(w_list).astype(jnp.bfloat16)       # (L, 9*feat, feat)
    b_stack = jnp.stack(b_list).astype(jnp.float32)        # (L, feat, 1)
    return w_stack, b_stack


# ---------------------------------------------------------------------------
# FFDNet pixel (un)shuffle, matching utils.downsample/upsample ordering
# (output channel = 4*c + idx, idx = 2*i + j, idxL = [(0,0),(0,1),(1,0),(1,1)]).
# ---------------------------------------------------------------------------
def _make_dncnn_input(x, noise_sigma):
    n, c, h, w = x.shape
    hh, wh = h // 2, w // 2
    noise_map = jnp.broadcast_to(noise_sigma.reshape(n, 1, 1, 1), (n, c, hh, wh))
    x_up = (x.reshape(n, c, hh, 2, wh, 2)
             .transpose(0, 1, 3, 5, 2, 4)
             .reshape(n, 4 * c, hh, wh))
    return jnp.concatenate([noise_map, x_up], axis=1)        # (N, 5C, Hh, Wh)


def _upsample(h, c, h_full, w_full):
    n = h.shape[0]
    hh, wh = h_full // 2, w_full // 2
    return (h.reshape(n, c, 2, 2, hh, wh)
             .transpose(0, 1, 4, 2, 5, 3)
             .reshape(n, c, h_full, w_full))


def ffdnet_forward(w_stack, b_stack, x, noise_sigma):
    """x: (N, C, H, W) f32 NCHW, noise_sigma: (N,) f32 -> (N, C, H, W) f32."""
    n, c, h, w = x.shape
    hh, wh = h // 2, w // 2
    hp, wp = hh + 2, wh + 2
    feat = w_stack.shape[-1]
    in_ch, out_ch = 5 * c, 4 * c
    p = ((hp * wp + 127) // 128) * 128                       # lane-dense spatial extent

    x_cat = _make_dncnn_input(x, noise_sigma)                # (N, 5C, Hh, Wh)

    # Stage the initial activation buffer: channels-major, flattened spatial with a
    # 1-px zero halo, zero-extended to feat channels and to P lanes (feat-wide slab,
    # so the kernel never does narrow / masked input writes).
    buf0 = jnp.zeros((n, feat, hp, wp), jnp.float32)
    buf0 = buf0.at[:, :in_ch, 1:hh + 1, 1:wh + 1].set(x_cat)
    buf0 = buf0.reshape(n, feat, hp * wp)
    buf0 = jnp.pad(buf0, ((0, 0), (0, 0), (0, p - hp * wp))).astype(jnp.bfloat16)

    # 0/1 mask of valid interior positions inside the flattened halo-padded layout.
    rr = jnp.arange(p)
    yy, xx = rr // wp, rr % wp
    mask = ((yy >= 1) & (yy <= hh) & (xx >= 1) & (xx <= wh) & (rr < hp * wp))
    mask = mask.astype(jnp.float32).reshape(1, p)

    o = dncnn_fused(buf0, w_stack, b_stack, mask, wp)        # (N, feat, P) f32
    dn = (o[:, :out_ch, :hp * wp]
            .reshape(n, out_ch, hp, wp)[:, :, 1:hh + 1, 1:wh + 1])   # (N, 4C, Hh, Wh)
    return _upsample(dn, c, h, w)


# ---------------------------------------------------------------------------
# Pure-JAX reference (XLA conv) with matching bf16/f32 precision, for checking.
# ---------------------------------------------------------------------------
def ffdnet_reference(w_stack, b_stack, x, noise_sigma):
    n, c, h, w = x.shape
    hh, wh = h // 2, w // 2
    n_layers, _, feat = w_stack.shape
    in_ch, out_ch = 5 * c, 4 * c
    # Reconstruct per-layer HWIO weights from the kernel layout (same bf16 values).
    w_hwio = jnp.transpose(w_stack.reshape(n_layers, 3, 3, feat, feat), (0, 1, 2, 4, 3))

    x_cat = _make_dncnn_input(x, noise_sigma)
    hact = jnp.transpose(x_cat, (0, 2, 3, 1))                          # NHWC
    hact = jnp.pad(hact, ((0, 0), (0, 0), (0, 0), (0, feat - in_ch))).astype(jnp.bfloat16)
    y = None
    for li in range(n_layers):
        y = jax.lax.conv_general_dilated(
            hact, w_hwio[li], window_strides=(1, 1), padding="SAME",
            dimension_numbers=("NHWC", "HWIO", "NHWC"),
            preferred_element_type=jnp.float32)
        y = y + b_stack[li, :, 0][None, None, None, :]
        if li < n_layers - 1:
            hact = jnp.maximum(y, 0.0).astype(jnp.bfloat16)
    dn = jnp.transpose(y[..., :out_ch], (0, 3, 1, 2))                  # (N, 4C, Hh, Wh)
    return _upsample(dn, c, h, w)


if __name__ == "__main__":
    key = jax.random.PRNGKey(0)
    kx, ks, kp = jax.random.split(key, 3)

    # is_gray=True => C=1 input, H, W even
    N, C, H, W = 2, 1, 16, 16
    x = jax.random.normal(kx, (N, C, H, W), jnp.float32)
    noise_sigma = jax.random.uniform(ks, (N,), jnp.float32, minval=0.0, maxval=0.2)

    w_stack, b_stack = init_ffdnet_params(kp, is_gray=True)

    fwd = jax.jit(ffdnet_forward)
    y = jax.block_until_ready(fwd(w_stack, b_stack, x, noise_sigma))
    assert y.shape == (N, C, H, W), y.shape
    assert y.dtype == jnp.float32

    # Numerical check against a pure-JAX (XLA conv) reference with matching precision.
    y_ref = jax.block_until_ready(
        jax.jit(ffdnet_reference)(w_stack, b_stack, x, noise_sigma))
    max_err = float(jnp.max(jnp.abs(y - y_ref)))
    assert max_err < 5e-2, f"max abs error vs reference: {max_err}"

    print("KERNEL_OK")
</pallas_src>

<mosaic_0001>
module attributes {stable_mosaic.version = 11 : i64} {
  func.func @_dncnn_kernel(%arg0: i32, %arg1: i32, %arg2: memref<1x64x128xbf16, #tpu.memory_space<vmem>>, %arg3: memref<1x576x64xbf16, #tpu.memory_space<vmem>>, %arg4: memref<1x64x1xf32, #tpu.memory_space<vmem>>, %arg5: memref<1x128xf32, #tpu.memory_space<vmem>>, %arg6: memref<1x64x128xf32, #tpu.memory_space<vmem>>, %arg7: memref<64x128xbf16, #tpu.memory_space<vmem>>) attributes {dimension_semantics = [#tpu.dimension_semantics<parallel>, #tpu.dimension_semantics<arbitrary>], iteration_bounds = array<i64: 2, 15>, scalar_prefetch = 0 : i64, scratch_operands = 1 : i64, tpu.core_type = #tpu.core_type<tc>, window_params = [{transform_indices = @transform_0, window_bounds = array<i64: 1, 64, 128>}, {transform_indices = @transform_1, window_bounds = array<i64: 1, 576, 64>}, {transform_indices = @transform_2, window_bounds = array<i64: 1, 64, 1>}, {pipeline_mode = #tpu.pipeline_mode<synchronous>, transform_indices = @transform_3, window_bounds = array<i64: 1, 128>}, {transform_indices = @transform_4, window_bounds = array<i64: 1, 64, 128>}]} {
    %c0_i32 = arith.constant 0 : i32
    %0 = arith.cmpi eq, %arg1, %c0_i32 : i32
    %1 = arith.extui %0 : i1 to i32
    %c0_i32_0 = arith.constant 0 : i32
    %2 = arith.cmpi ne, %1, %c0_i32_0 : i32
    scf.if %2 {
      %c0_18 = arith.constant 0 : index
      %c0_19 = arith.constant 0 : index
      %c0_20 = arith.constant 0 : index
      %50 = vector.load %arg2[%c0_18, %c0_19, %c0_20] : memref<1x64x128xbf16, #tpu.memory_space<vmem>>, vector<1x64x128xbf16>
      %51 = vector.shape_cast %50 : vector<1x64x128xbf16> to vector<64x128xbf16>
      %c0_21 = arith.constant 0 : index
      %c0_22 = arith.constant 0 : index
      %52 = vector.load %arg7[%c0_21, %c0_22] : memref<64x128xbf16, #tpu.memory_space<vmem>>, vector<64x128xbf16>
      tpu.vector_store %arg7[%c0_21, %c0_22], %51 {strides = array<i32>} : memref<64x128xbf16, #tpu.memory_space<vmem>>, vector<64x128xbf16>,
    } else {
    }
    %c0 = arith.constant 0 : index
    %c0_1 = arith.constant 0 : index
    %3 = vector.load %arg7[%c0, %c0_1] : memref<64x128xbf16, #tpu.memory_space<vmem>>, vector<64x128xbf16>
    %cst = arith.constant 0.000000e+00 : f32
    %4 = vector.broadcast %cst : f32 to vector<64x128xf32>
    %c0_2 = arith.constant 0 : index
    %c0_3 = arith.constant 0 : index
    %c0_4 = arith.constant 0 : index
    %5 = vector.load %arg3[%c0_2, %c0_3, %c0_4] : memref<1x576x64xbf16, #tpu.memory_space<vmem>>, vector<1x192x64xbf16>
    %6 = vector.shape_cast %5 : vector<1x192x64xbf16> to vector<192x64xbf16>
    %cst_5 = arith.constant dense<0.000000e+00> : vector<192x128xf32>
    %7 = tpu.matmul %6, %3, %cst_5 {dimension_numbers = #tpu.dot_dimension_numbers<[1], [0], [0], [1], [0, 0, 1, 1], [], []>} : vector<192x64xbf16>, vector<64x128xbf16>, vector<192x128xf32> -> vector<192x128xf32>
    %8 = vector.extract_strided_slice %7 {offsets = [0, 0], sizes = [64, 128], strides = [1, 1]} : vector<192x128xf32> to vector<64x128xf32>
    %c11_i32 = arith.constant 11 : i32
    %9 = tpu.dynamic_rotate %8 by %c11_i32 dim 1 : vector<64x128xf32>, i32 -> vector<64x128xf32>
    %10 = arith.addf %4, %9 : vector<64x128xf32>
    %11 = vector.extract_strided_slice %7 {offsets = [64, 0], sizes = [64, 128], strides = [1, 1]} : vector<192x128xf32> to vector<64x128xf32>
    %c10_i32 = arith.constant 10 : i32
    %12 = tpu.dynamic_rotate %11 by %c10_i32 dim 1 : vector<64x128xf32>, i32 -> vector<64x128xf32>
    %13 = arith.addf %10, %12 : vector<64x128xf32>
    %14 = vector.extract_strided_slice %7 {offsets = [128, 0], sizes = [64, 128], strides = [1, 1]} : vector<192x128xf32> to vector<64x128xf32>
    %c9_i32 = arith.constant 9 : i32
    %15 = tpu.dynamic_rotate %14 by %c9_i32 dim 1 : vector<64x128xf32>, i32 -> vector<64x128xf32>
    %16 = arith.addf %13, %15 : vector<64x128xf32>
    %c0_6 = arith.constant 0 : index
    %c192 = arith.constant 192 : index
    %c0_7 = arith.constant 0 : index
    %17 = vector.load %arg3[%c0_6, %c192, %c0_7] : memref<1x576x64xbf16, #tpu.memory_space<vmem>>, vector<1x192x64xbf16>
    %18 = vector.shape_cast %17 : vector<1x192x64xbf16> to vector<192x64xbf16>
    %cst_8 = arith.constant dense<0.000000e+00> : vector<192x128xf32>
    %19 = tpu.matmul %18, %3, %cst_8 {dimension_numbers = #tpu.dot_dimension_numbers<[1], [0], [0], [1], [0, 0, 1, 1], [], []>} : vector<192x64xbf16>, vector<64x128xbf16>, vector<192x128xf32> -> vector<192x128xf32>
    %20 = vector.extract_strided_slice %19 {offsets = [0, 0], sizes = [64, 128], strides = [1, 1]} : vector<192x128xf32> to vector<64x128xf32>
    %c1_i32 = arith.constant 1 : i32
    %21 = tpu.dynamic_rotate %20 by %c1_i32 dim 1 : vector<64x128xf32>, i32 -> vector<64x128xf32>
    %22 = arith.addf %16, %21 : vector<64x128xf32>
    %23 = vector.extract_strided_slice %19 {offsets = [64, 0], sizes = [64, 128], strides = [1, 1]} : vector<192x128xf32> to vector<64x128xf32>
    %24 = arith.addf %22, %23 : vector<64x128xf32>
    %25 = vector.extract_strided_slice %19 {offsets = [128, 0], sizes = [64, 128], strides = [1, 1]} : vector<192x128xf32> to vector<64x128xf32>
    %c127_i32 = arith.constant 127 : i32
    %26 = tpu.dynamic_rotate %25 by %c127_i32 dim 1 : vector<64x128xf32>, i32 -> vector<64x128xf32>
    %27 = arith.addf %24, %26 : vector<64x128xf32>
    %c0_9 = arith.constant 0 : index
    %c384 = arith.constant 384 : index
    %c0_10 = arith.constant 0 : index
    %28 = vector.load %arg3[%c0_9, %c384, %c0_10] : memref<1x576x64xbf16, #tpu.memory_space<vmem>>, vector<1x192x64xbf16>
    %29 = vector.shape_cast %28 : vector<1x192x64xbf16> to vector<192x64xbf16>
    %cst_11 = arith.constant dense<0.000000e+00> : vector<192x128xf32>
    %30 = tpu.matmul %29, %3, %cst_11 {dimension_numbers = #tpu.dot_dimension_numbers<[1], [0], [0], [1], [0, 0, 1, 1], [], []>} : vector<192x64xbf16>, vector<64x128xbf16>, vector<192x128xf32> -> vector<192x128xf32>
    %31 = vector.extract_strided_slice %30 {offsets = [0, 0], sizes = [64, 128], strides = [1, 1]} : vector<192x128xf32> to vector<64x128xf32>
    %c119_i32 = arith.constant 119 : i32
    %32 = tpu.dynamic_rotate %31 by %c119_i32 dim 1 : vector<64x128xf32>, i32 -> vector<64x128xf32>
    %33 = arith.addf %27, %32 : vector<64x128xf32>
    %34 = vector.extract_strided_slice %30 {offsets = [64, 0], sizes = [64, 128], strides = [1, 1]} : vector<192x128xf32> to vector<64x128xf32>
    %c118_i32 = arith.constant 118 : i32
    %35 = tpu.dynamic_rotate %34 by %c118_i32 dim 1 : vector<64x128xf32>, i32 -> vector<64x128xf32>
    %36 = arith.addf %33, %35 : vector<64x128xf32>
    %37 = vector.extract_strided_slice %30 {offsets = [128, 0], sizes = [64, 128], strides = [1, 1]} : vector<192x128xf32> to vector<64x128xf32>
    %c117_i32 = arith.constant 117 : i32
    %38 = tpu.dynamic_rotate %37 by %c117_i32 dim 1 : vector<64x128xf32>, i32 -> vector<64x128xf32>
    %39 = arith.addf %36, %38 : vector<64x128xf32>
    %c0_12 = arith.constant 0 : index
    %c0_13 = arith.constant 0 : index
    %c0_14 = arith.constant 0 : index
    %40 = vector.load %arg4[%c0_12, %c0_13, %c0_14] : memref<1x64x1xf32, #tpu.memory_space<vmem>>, vector<1x64x1xf32>
    %41 = vector.shape_cast %40 : vector<1x64x1xf32> to vector<64x1xf32>
    %42 = vector.broadcast %41 : vector<64x1xf32> to vector<64x128xf32>
    %43 = arith.addf %39, %42 : vector<64x128xf32>
    %c14_i32 = arith.constant 14 : i32
    %44 = arith.cmpi slt, %arg1, %c14_i32 : i32
    %45 = arith.extui %44 : i1 to i32
    %c0_i32_15 = arith.constant 0 : i32
    %46 = arith.cmpi ne, %45, %c0_i32_15 : i32
    scf.if %46 {
      %cst_18 = arith.constant 0.000000e+00 : f32
      %50 = vector.broadcast %cst_18 : f32 to vector<64x128xf32>
      %51 = arith.maximumf %43, %50 : vector<64x128xf32>
      %c0_19 = arith.constant 0 : index
      %c0_20 = arith.constant 0 : index
      %52 = vector.load %arg5[%c0_19, %c0_20] : memref<1x128xf32, #tpu.memory_space<vmem>>, vector<1x128xf32>
      %53 = vector.broadcast %52 : vector<1x128xf32> to vector<64x128xf32>
      %54 = arith.mulf %51, %53 : vector<64x128xf32>
      %55 = arith.truncf %54 : vector<64x128xf32> to vector<64x128xbf16>
      %c0_21 = arith.constant 0 : index
      %c0_22 = arith.constant 0 : index
      %56 = vector.load %arg7[%c0_21, %c0_22] : memref<64x128xbf16, #tpu.memory_space<vmem>>, vector<64x128xbf16>
      tpu.vector_store %arg7[%c0_21, %c0_22], %55 {strides = array<i32>} : memref<64x128xbf16, #tpu.memory_space<vmem>>, vector<64x128xbf16>,
    } else {
    }
    %c14_i32_16 = arith.constant 14 : i32
    %47 = arith.cmpi eq, %arg1, %c14_i32_16 : i32
    %48 = arith.extui %47 : i1 to i32
    %c0_i32_17 = arith.constant 0 : i32
    %49 = arith.cmpi ne, %48, %c0_i32_17 : i32
    scf.if %49 {
      %c0_18 = arith.constant 0 : index
      %c0_19 = arith.constant 0 : index
      %c0_20 = arith.constant 0 : index
      %50 = vector.load %arg6[%c0_18, %c0_19, %c0_20] : memref<1x64x128xf32, #tpu.memory_space<vmem>>, vector<1x64x128xf32>
      %51 = vector.shape_cast %50 : vector<1x64x128xf32> to vector<64x128xf32>
      %52 = vector.shape_cast %43 : vector<64x128xf32> to vector<1x64x128xf32>
      tpu.vector_store %arg6[%c0_18, %c0_19, %c0_20], %52 {strides = array<i32>} : memref<1x64x128xf32, #tpu.memory_space<vmem>>, vector<1x64x128xf32>,
    } else {
    }
    return
  }
  func.func @transform_0(%arg0: i32, %arg1: i32) -> (i32, i32, i32) {
    %c0_i32 = arith.constant 0 : i32
    %c0_i32_0 = arith.constant 0 : i32
    %c0_i32_1 = arith.constant 0 : i32
    return %arg0, %c0_i32, %c0_i32_0 : i32, i32, i32
  }
  func.func @transform_1(%arg0: i32, %arg1: i32) -> (i32, i32, i32) {
    %c0_i32 = arith.constant 0 : i32
    %c0_i32_0 = arith.constant 0 : i32
    %c0_i32_1 = arith.constant 0 : i32
    return %arg1, %c0_i32, %c0_i32_0 : i32, i32, i32
  }
  func.func @transform_2(%arg0: i32, %arg1: i32) -> (i32, i32, i32) {
    %c0_i32 = arith.constant 0 : i32
    %c0_i32_0 = arith.constant 0 : i32
    %c0_i32_1 = arith.constant 0 : i32
    return %arg1, %c0_i32, %c0_i32_0 : i32, i32, i32
  }
  func.func @transform_3(%arg0: i32, %arg1: i32) -> (i32, i32) {
    %c0_i32 = arith.constant 0 : i32
    %c0_i32_0 = arith.constant 0 : i32
    %c0_i32_1 = arith.constant 0 : i32
    return %c0_i32, %c0_i32_0 : i32, i32
  }
  func.func @transform_4(%arg0: i32, %arg1: i32) -> (i32, i32, i32) {
    %c0_i32 = arith.constant 0 : i32
    %c0_i32_0 = arith.constant 0 : i32
    %c0_i32_1 = arith.constant 0 : i32
    return %arg0, %c0_i32, %c0_i32_0 : i32, i32, i32
  }
}

</mosaic_0001>

<llo_original>
// kernel: ffdnet_forward.1
$region0: #{ffdnet_forward.1}
  #allocation0 [shape = 'u32[]', space=smem, size = 0x4, offset = 0x4, fixed_abs, tag = 'smem constant byte address 0x4 - core index']
  #allocation1 [shape = 'u32[72,128]{1,0:T(1,128)}', space=vmem, size = 0x9000, scoped, tag = 'internal scratch']
  #allocation2 [shape = 'bf16[64,128]{1,0:T(8,128)(2,1)}', space=vmem, size = 0x4000, scoped, tag = 'scratch operand']
  %s0 = inlined_call_operand.vmem [shape: bf16[2,64,128], index: 0, kind: input, shape index: {}]
  %s1 = inlined_call_operand.vmem [shape: bf16[15,576,64], index: 1, kind: input, shape index: {}]
  %s2 = inlined_call_operand.vmem [shape: f32[15,64,1], index: 2, kind: input, shape index: {}]
  %s3 = inlined_call_operand.vmem [shape: f32[1,128], index: 3, kind: input, shape index: {}]
  %s4 = inlined_call_operand.vmem [shape: f32[2,64,128], index: 4, kind: output, shape index: {}]
  %s5 = sld [smem:[#allocation0]]
  $region61: #{ffdnet_forward.1} parent=0
    _
  %s7 = ssub.s32 1, %s5
  %s8 = scalar_select 0, %s7, %s5
  loop: start=0, step=1, limit=32
  $region2: #{ffdnet_forward.1} parent=0 // loop_pre_header
    _
  $region3: #{ffdnet_forward.1} parent=0 // loop_header
    %s10 = sphi 0, %s14
    %p11 = scmp.ge.s32.totalorder %s10, 32
    %s17 = sphi 0, %s29
    %s18 = sphi 0, %s25
    %s19 = sphi 0, %s17
    %s20 = sphi 0, %s18
    %s21 = sphi 0, %s19
    %s22 = sphi 0, %s20
    %s32 = sphi 0, %s34
    %s35 = sphi 0, %s32
    %s36 = sphi 0, %s35
    %s52 = sphi 0, %s36
    %s58 = sphi 0, %s60
    %s61 = sphi 0, %s58
    %s62 = sphi 0, %s61
    %s78 = sphi 0, %s62
    %s84 = sphi 0, %s86
    %s87 = sphi 0, %s84
    %s88 = sphi 0, %s87
    %s104 = sphi 0, %s88
    %s108 = sphi 0, %s108
    %s110 = sphi 0, %s108
    %s111 = sphi 0, %s110
    %s125 = sphi 0, %s111
    %s131 = sphi 0, %s133
    %s134 = sphi 0, %s131
    %s135 = sphi 0, %s134
    %s151 = sphi 0, %s135
  $region4: #{ffdnet_forward.1} parent=0 // loop_header_branch
    %13 = sbr.rel (%p11) target = $region8
  $region5: #{ffdnet_forward.1} parent=0 // loop_body
    %s15 = ssub.s32 %s10, 1
    %s16 = ssub.s32 %s10, 2
    %s23 = sadd.s32 1, %s18
    %p24 = scmp.ge.s32.totalorder %s23, 15
    %s25 = scalar_select %p24, 0, %s23
    %s26 = sadd.s32 1, %s17
    %s27 = scalar_select %p24, %s26, %s17
    %p28 = scmp.ge.s32.totalorder %s27, 2
    %s29 = scalar_select %p28, 0, %s27
    %s30 = ssub.s32 %s17, %s29
    %p31 = scmp.eq.s32.totalorder %s30, 0
    %s33 = sadd.s32 %s32, 1
    %s34 = scalar_select %p31, %s32, %s33
    %p37 = pneg %p31
    %p38 = scmp.eq.s32.totalorder %s10, 29
    %p39 = por %p37, %p38
    %p40 = scmp.ne.s32.totalorder %s32, %s35
    %p41 = scmp.eq.s32.totalorder %s10, 0
    %p42 = por %p40, %p41
    %p43 = scmp.ne.s32.totalorder %s32, %s35
    %p44 = scmp.eq.s32.totalorder %s15, 29
    %p45 = por %p43, %p44
    %p46 = scmp.ne.s32.totalorder %s35, %s36
    %p47 = scmp.eq.s32.totalorder %s15, 0
    %p48 = por %p46, %p47
    %p49 = scmp.ne.s32.totalorder %s35, %s36
    %p50 = scmp.eq.s32.totalorder %s16, 29
    %p51 = por %p49, %p50
    %p53 = scmp.ne.s32.totalorder %s36, %s52
    %p54 = scmp.eq.s32.totalorder %s16, 0
    %p55 = por %p53, %p54
    %s56 = ssub.s32 %s18, %s25
    %p57 = scmp.eq.s32.totalorder %s56, 0
    %s59 = sadd.s32 %s58, 1
    %s60 = scalar_select %p57, %s58, %s59
    %p63 = pneg %p57
    %p64 = scmp.eq.s32.totalorder %s10, 29
    %p65 = por %p63, %p64
    %p66 = scmp.ne.s32.totalorder %s58, %s61
    %p67 = scmp.eq.s32.totalorder %s10, 0
    %p68 = por %p66, %p67
    %p69 = scmp.ne.s32.totalorder %s58, %s61
    %p70 = scmp.eq.s32.totalorder %s15, 29
    %p71 = por %p69, %p70
    %p72 = scmp.ne.s32.totalorder %s61, %s62
    %p73 = scmp.eq.s32.totalorder %s15, 0
    %p74 = por %p72, %p73
    %p75 = scmp.ne.s32.totalorder %s61, %s62
    %p76 = scmp.eq.s32.totalorder %s16, 29
    %p77 = por %p75, %p76
    %p79 = scmp.ne.s32.totalorder %s62, %s78
    %p80 = scmp.eq.s32.totalorder %s16, 0
    %p81 = por %p79, %p80
    %s82 = ssub.s32 %s18, %s25
    %p83 = scmp.eq.s32.totalorder %s82, 0
    %s85 = sadd.s32 %s84, 1
    %s86 = scalar_select %p83, %s84, %s85
    %p89 = pneg %p83
    %p90 = scmp.eq.s32.totalorder %s10, 29
    %p91 = por %p89, %p90
    %p92 = scmp.ne.s32.totalorder %s84, %s87
    %p93 = scmp.eq.s32.totalorder %s10, 0
    %p94 = por %p92, %p93
    %p95 = scmp.ne.s32.totalorder %s84, %s87
    %p96 = scmp.eq.s32.totalorder %s15, 29
    %p97 = por %p95, %p96
    %p98 = scmp.ne.s32.totalorder %s87, %s88
    %p99 = scmp.eq.s32.totalorder %s15, 0
    %p100 = por %p98, %p99
    %p101 = scmp.ne.s32.totalorder %s87, %s88
    %p102 = scmp.eq.s32.totalorder %s16, 29
    %p103 = por %p101, %p102
    %p105 = scmp.ne.s32.totalorder %s88, %s104
    %p106 = scmp.eq.s32.totalorder %s16, 0
    %p107 = por %p105, %p106
    %s109 = sadd.s32 %s108, 1
    %p112 = scmp.eq.s32.totalorder %s10, 29
    %p113 = scmp.ne.s32.totalorder %s108, %s110
    %p114 = scmp.eq.s32.totalorder %s10, 0
    %p115 = por %p113, %p114
    %p116 = scmp.ne.s32.totalorder %s108, %s110
    %p117 = scmp.eq.s32.totalorder %s15, 29
    %p118 = por %p116, %p117
    %p119 = scmp.ne.s32.totalorder %s110, %s111
    %p120 = scmp.eq.s32.totalorder %s15, 0
    %p121 = por %p119, %p120
    %p122 = scmp.ne.s32.totalorder %s110, %s111
    %p123 = scmp.eq.s32.totalorder %s16, 29
    %p124 = por %p122, %p123
    %p126 = scmp.ne.s32.totalorder %s111, %s125
    %p127 = scmp.eq.s32.totalorder %s16, 0
    %p128 = por %p126, %p127
    %s129 = ssub.s32 %s17, %s29
    %p130 = scmp.eq.s32.totalorder %s129, 0
    %s132 = sadd.s32 %s131, 1
    %s133 = scalar_select %p130, %s131, %s132
    %p136 = pneg %p130
    %p137 = scmp.eq.s32.totalorder %s10, 29
    %p138 = por %p136, %p137
    %p139 = scmp.ne.s32.totalorder %s131, %s134
    %p140 = scmp.eq.s32.totalorder %s10, 0
    %p141 = por %p139, %p140
    %p142 = scmp.ne.s32.totalorder %s131, %s134
    %p143 = scmp.eq.s32.totalorder %s15, 29
    %p144 = por %p142, %p143
    %p145 = scmp.ne.s32.totalorder %s134, %s135
    %p146 = scmp.eq.s32.totalorder %s15, 0
    %p147 = por %p145, %p146
    %p148 = scmp.ne.s32.totalorder %s134, %s135
    %p149 = scmp.eq.s32.totalorder %s16, 29
    %p150 = por %p148, %p149
    %p152 = scmp.ne.s32.totalorder %s135, %s151
    %p153 = scmp.eq.s32.totalorder %s16, 0
    %p154 = por %p152, %p153
    %p155 = scmp.le.s32.totalorder 1, %s10
    %p156 = scmp.lt.s32.totalorder %s10, 31
    %p157 = pnand %p155, %p156
    %p158 = pneg %p157
    // Predicated region
    $region9: #{ffdnet_forward.1} parent=5 // pred_check
      _
    $region10: #{ffdnet_forward.1} parent=5 // pred_check_branch
      %160 = sbr.rel (%p157) target = $region12
    $region11: #{ffdnet_forward.1} parent=5 // pred_region
      %s161 = ssub.s32 %s10, 1
      // Predicated region
      $region13: #{ffdnet_forward.1} parent=11 // pred_check
        %p162 = pneg %p121
      $region14: #{ffdnet_forward.1} parent=11 // pred_check_branch
        %164 = sbr.rel (%p162) target = $region16
      $region15: #{ffdnet_forward.1} parent=11 // pred_region
        _
      $region16: #{ffdnet_forward.1} parent=11 // pred_fallthru
        _
    $region12: #{ffdnet_forward.1} parent=5 // pred_fallthru
      _
    %p165 = scmp.lt.s32.totalorder %s10, 30
    // Predicated region
    $region17: #{ffdnet_forward.1} parent=5 // pred_check
      %p166 = pneg %p165
    $region18: #{ffdnet_forward.1} parent=5 // pred_check_branch
      %168 = sbr.rel (%p166) target = $region20
    $region19: #{ffdnet_forward.1} parent=5 // pred_region
      // Predicated region
      $region21: #{ffdnet_forward.1} parent=19 // pred_check
        %p169 = pneg %p42
      $region22: #{ffdnet_forward.1} parent=19 // pred_check_branch
        %171 = sbr.rel (%p169) target = $region24
      $region23: #{ffdnet_forward.1} parent=19 // pred_region
        %p172 = scmp.lt.s32.totalorder %s17, 1
        %s173 = scalar_select %p172, %s17, 1
        %s174 = smul.addr %s173, 8
        %s175 = smul.addr %s174, 4
        %s176 = scalar_lea.vmem %s0, %s175
      $region24: #{ffdnet_forward.1} parent=19 // pred_fallthru
        _
      // Predicated region
      $region25: #{ffdnet_forward.1} parent=19 // pred_check
        %p177 = pneg %p68
      $region26: #{ffdnet_forward.1} parent=19 // pred_check_branch
        %179 = sbr.rel (%p177) target = $region28
      $region27: #{ffdnet_forward.1} parent=19 // pred_region
        %p180 = scmp.lt.s32.totalorder %s18, 14
        %s181 = scalar_select %p180, %s18, 14
        %s182 = smul.addr %s181, 72
        %s183 = smul.addr %s182, 4
        %s184 = scalar_lea.vmem %s1, %s183
      $region28: #{ffdnet_forward.1} parent=19 // pred_fallthru
        _
      // Predicated region
      $region29: #{ffdnet_forward.1} parent=19 // pred_check
        %p185 = pneg %p94
      $region30: #{ffdnet_forward.1} parent=19 // pred_check_branch
        %187 = sbr.rel (%p185) target = $region32
      $region31: #{ffdnet_forward.1} parent=19 // pred_region
        %p188 = scmp.lt.s32.totalorder %s18, 14
        %s189 = scalar_select %p188, %s18, 14
        %s190 = smul.addr %s189, 8
        %s191 = smul.addr %s190, 8
        %s192 = scalar_lea.vmem %s2, %s191
      $region32: #{ffdnet_forward.1} parent=19 // pred_fallthru
        _
    $region20: #{ffdnet_forward.1} parent=5 // pred_fallthru
      _
    %p193 = scmp.le.s32.totalorder 1, %s10
    %p194 = scmp.lt.s32.totalorder %s10, 31
    %p195 = pnand %p193, %p194
    %p196 = pneg %p195
    // Predicated region
    $region33: #{ffdnet_forward.1} parent=5 // pred_check
      _
    $region34: #{ffdnet_forward.1} parent=5 // pred_check_branch
      %198 = sbr.rel (%p195) target = $region36
    $region35: #{ffdnet_forward.1} parent=5 // pred_region
      %s199 = ssub.s32 %s10, 1
      %p200 = scmp.lt.s32.totalorder %s19, 1
      %s201 = scalar_select %p200, %s19, 1
      %s202 = smul.addr %s201, 8
      %s203 = smul.addr %s202, 4
      %s204 = scalar_lea.vmem %s0, %s203
      %p205 = pneg %p48
      %p206 = pneg %p45
      %p207 = scmp.lt.s32.totalorder %s20, 14
      %s208 = scalar_select %p207, %s20, 14
      %s209 = smul.addr %s208, 72
      %s210 = smul.addr %s209, 4
      %s211 = scalar_lea.vmem %s1, %s210
      %p212 = pneg %p74
      %p213 = pneg %p71
      %p214 = scmp.lt.s32.totalorder %s20, 14
      %s215 = scalar_select %p214, %s20, 14
      %s216 = smul.addr %s215, 8
      %s217 = smul.addr %s216, 8
      %s218 = scalar_lea.vmem %s2, %s217
      %p219 = pneg %p100
      %p220 = pneg %p97
      %p221 = pneg %p121
      %p222 = pneg %p118
      %p223 = pneg %p147
      %p224 = pneg %p144
      %p225 = scmp.lt.s32.totalorder %s19, 1
      %s226 = scalar_select %p225, %s19, 1
      %s227 = smul.addr %s226, 8
      %s228 = smul.addr %s227, 8
      %s229 = scalar_lea.vmem %s4, %s228
      %p230 = scmp.lt.s32.totalorder %s19, 1
      %s231 = scalar_select %p230, %s19, 1
      %s232 = smul.addr %s231, 8
      %s233 = smul.addr %s232, 4
      %s234 = scalar_lea.vmem %s0, %s233
      %p235 = scmp.lt.s32.totalorder %s20, 14
      %s236 = scalar_select %p235, %s20, 14
      %s237 = smul.addr %s236, 72
      %s238 = smul.addr %s237, 4
      %s239 = scalar_lea.vmem %s1, %s238
      %p240 = scmp.lt.s32.totalorder %s20, 14
      %s241 = scalar_select %p240, %s20, 14
      %s242 = smul.addr %s241, 8
      %s243 = smul.addr %s242, 8
      %s244 = scalar_lea.vmem %s2, %s243
      %p245 = scmp.lt.s32.totalorder %s19, 1
      %s246 = scalar_select %p245, %s19, 1
      %s247 = smul.addr %s246, 8
      %s248 = smul.addr %s247, 8
      %s249 = scalar_lea.vmem %s4, %s248
      %p251 = scmp.eq.s32.totalorder %s20, 0
      // Predicated region
      $region37: #{ffdnet_forward.1} parent=35 // pred_check
        %p252 = pneg %p251
      $region38: #{ffdnet_forward.1} parent=35 // pred_check_branch
        %254 = sbr.rel (%p252) target = $region40
      $region39: #{ffdnet_forward.1} parent=35 // pred_region
        %v255 = vld [vmem:[%s234] sm:$0xf]
        %v256 = vld [vmem:[%s234 + $0x4] sm:$0xf]
        %v257 = vld [vmem:[%s234 + $0x8] sm:$0xf]
        %v258 = vld [vmem:[%s234 + $0xc] sm:$0xf]
        %v259 = vld [vmem:[%s234 + $0x10] sm:$0xf]
        %v260 = vld [vmem:[%s234 + $0x14] sm:$0xf]
        %v261 = vld [vmem:[%s234 + $0x18] sm:$0xf]
        %v262 = vld [vmem:[%s234 + $0x1c] sm:$0xf]
        %263 = vst [vmem:[#allocation2] sm:$0xf] %v255
        %264 = vst [vmem:[#allocation2 + $0x4] sm:$0xf] %v256
        %265 = vst [vmem:[#allocation2 + $0x8] sm:$0xf] %v257
        %266 = vst [vmem:[#allocation2 + $0xc] sm:$0xf] %v258
        %267 = vst [vmem:[#allocation2 + $0x10] sm:$0xf] %v259
        %268 = vst [vmem:[#allocation2 + $0x14] sm:$0xf] %v260
        %269 = vst [vmem:[#allocation2 + $0x18] sm:$0xf] %v261
        %270 = vst [vmem:[#allocation2 + $0x1c] sm:$0xf] %v262
      $region40: #{ffdnet_forward.1} parent=35 // pred_fallthru
        _
      %v271 = vld [vmem:[#allocation2] sm:$0xf]
      %v272 = vld [vmem:[#allocation2 + $0x4] sm:$0xf]
      %v273 = vld [vmem:[#allocation2 + $0x8] sm:$0xf]
      %v274 = vld [vmem:[#allocation2 + $0xc] sm:$0xf]
      %v275 = vld [vmem:[#allocation2 + $0x10] sm:$0xf]
      %v276 = vld [vmem:[#allocation2 + $0x14] sm:$0xf]
      %v277 = vld [vmem:[#allocation2 + $0x18] sm:$0xf]
      %v278 = vld [vmem:[#allocation2 + $0x1c] sm:$0xf]
      %v279 = vld [vmem:[%s239] sm:$0xf]
      %v280 = vld [vmem:[%s239 + $0x4] sm:$0xf]
      %v281 = vld [vmem:[%s239 + $0x8] sm:$0xf]
      %v282 = vld [vmem:[%s239 + $0xc] sm:$0xf]
      %v283 = vld [vmem:[%s239 + $0x10] sm:$0xf]
      %v284 = vld [vmem:[%s239 + $0x14] sm:$0xf]
      %v285 = vld [vmem:[%s239 + $0x18] sm:$0xf]
      %v286 = vld [vmem:[%s239 + $0x1c] sm:$0xf]
      %v287 = vld [vmem:[%s239 + $0x20] sm:$0xf]
      %v288 = vld [vmem:[%s239 + $0x24] sm:$0xf]
      %v289 = vld [vmem:[%s239 + $0x28] sm:$0xf]
      %v290 = vld [vmem:[%s239 + $0x2c] sm:$0xf]
      %v291 = vld [vmem:[%s239 + $0x30] sm:$0xf]
      %v292 = vld [vmem:[%s239 + $0x34] sm:$0xf]
      %v293 = vld [vmem:[%s239 + $0x38] sm:$0xf]
      %v294 = vld [vmem:[%s239 + $0x3c] sm:$0xf]
      %v295 = vld [vmem:[%s239 + $0x40] sm:$0xf]
      %v296 = vld [vmem:[%s239 + $0x44] sm:$0xf]
      %v297 = vld [vmem:[%s239 + $0x48] sm:$0xf]
      %v298 = vld [vmem:[%s239 + $0x4c] sm:$0xf]
      %v299 = vld [vmem:[%s239 + $0x50] sm:$0xf]
      %v300 = vld [vmem:[%s239 + $0x54] sm:$0xf]
      %v301 = vld [vmem:[%s239 + $0x58] sm:$0xf]
      %v302 = vld [vmem:[%s239 + $0x5c] sm:$0xf]
      %v327 = vunpack.c.l.b16 %v279
      %v328 = vunpack.c.l.b16 %v280
      %v329 = vunpack.c.l.b16 %v281
      %v330 = vunpack.c.l.b16 %v282
      %v331 = vunpack.c.l.b16 %v283
      %v332 = vunpack.c.l.b16 %v284
      %v333 = vunpack.c.l.b16 %v285
      %v334 = vunpack.c.l.b16 %v286
      %v335 = vunpack.c.l.b16 %v287
      %v336 = vunpack.c.l.b16 %v288
      %v337 = vunpack.c.l.b16 %v289
      %v338 = vunpack.c.l.b16 %v290
      %v339 = vunpack.c.l.b16 %v291
      %v340 = vunpack.c.l.b16 %v292
      %v341 = vunpack.c.l.b16 %v293
      %v342 = vunpack.c.l.b16 %v294
      %v343 = vunpack.c.l.b16 %v295
      %v344 = vunpack.c.l.b16 %v296
      %v345 = vunpack.c.l.b16 %v297
      %v346 = vunpack.c.l.b16 %v298
      %v347 = vunpack.c.l.b16 %v299
      %v348 = vunpack.c.l.b16 %v300
      %v349 = vunpack.c.l.b16 %v301
      %v350 = vunpack.c.l.b16 %v302
      %v351 = vpack.c.b16 %v328, %v327
      %v352 = vpack.c.b16 %v330, %v329
      %v353 = vpack.c.b16 %v332, %v331
      %v354 = vpack.c.b16 %v334, %v333
      %v355 = vpack.c.b16 %v336, %v335
      %v356 = vpack.c.b16 %v338, %v337
      %v357 = vpack.c.b16 %v340, %v339
      %v358 = vpack.c.b16 %v342, %v341
      %v359 = vpack.c.b16 %v344, %v343
      %v360 = vpack.c.b16 %v346, %v345
      %v361 = vpack.c.b16 %v348, %v347
      %v362 = vpack.c.b16 %v350, %v349
      %v371 = vunpack.c.l.b16 %v271
      %v372 = vunpack.c.l.b16 %v272
      %v373 = vunpack.c.l.b16 %v273
      %v374 = vunpack.c.l.b16 %v274
      %v375 = vunpack.c.l.b16 %v275
      %v376 = vunpack.c.l.b16 %v276
      %v377 = vunpack.c.l.b16 %v277
      %v378 = vunpack.c.l.b16 %v278
      %v379 = vpack.c.b16 %v372, %v371
      %v380 = vpack.c.b16 %v374, %v373
      %v381 = vpack.c.b16 %v376, %v375
      %v382 = vpack.c.b16 %v378, %v377
      %vm387 = vcmask 523264
      %v389 = vsel %vm387, %v351, 0
      %v392 = vsel %vm387, %v352, 0
      %v395 = vsel %vm387, %v353, 0
      %v398 = vsel %vm387, %v354, 0
      %v401 = vsel %vm387, %v355, 0
      %v404 = vsel %vm387, %v356, 0
      %v407 = vsel %vm387, %v357, 0
      %v410 = vsel %vm387, %v358, 0
      %v413 = vsel %vm387, %v359, 0
      %v416 = vsel %vm387, %v360, 0
      %v419 = vsel %vm387, %v361, 0
      %v422 = vsel %vm387, %v362, 0
      %424 = vmatpush.bf16.msra.mxu0 0
      %425 = vmatpush.bf16.msra.mxu0 0
      %426 = vmatpush.bf16.msra.mxu0 0
      %427 = vmatpush.bf16.msra.mxu0 0
      %428 = vmatpush.bf16.msra.mxu0 %v382
      %429 = vmatpush.bf16.msra.mxu0 %v381
      %430 = vmatpush.bf16.msra.mxu0 %v380
      %431 = vmatpush.bf16.msra.mxu0 %v379
      %432 = vmatmul.bf16.gmra.mxu0 %v389
      %v433 = vpop.f32.mrf.mxu0
      %v434 = vadd.f32 0.0, %v433
      %v435 = vpop.f32.mrf.mxu0
      %v436 = vadd.f32 0.0, %v435
      %437 = vmatmul.bf16.gmra.mxu0 %v392
      %v438 = vpop.f32.mrf.mxu0
      %v439 = vadd.f32 0.0, %v438
      %v440 = vpop.f32.mrf.mxu0
      %v441 = vadd.f32 0.0, %v440
      %442 = vmatmul.bf16.gmra.mxu0 %v395
      %v443 = vpop.f32.mrf.mxu0
      %v444 = vadd.f32 0.0, %v443
      %v445 = vpop.f32.mrf.mxu0
      %v446 = vadd.f32 0.0, %v445
      %447 = vmatmul.bf16.gmra.mxu0 %v398
      %v448 = vpop.f32.mrf.mxu0
      %v449 = vadd.f32 0.0, %v448
      %v450 = vpop.f32.mrf.mxu0
      %v451 = vadd.f32 0.0, %v450
      %452 = vmatmul.bf16.gmra.mxu0 %v401
      %v453 = vpop.f32.mrf.mxu0
      %v454 = vadd.f32 0.0, %v453
      %v455 = vpop.f32.mrf.mxu0
      %v456 = vadd.f32 0.0, %v455
      %457 = vmatmul.bf16.gmra.mxu0 %v404
      %v458 = vpop.f32.mrf.mxu0
      %v459 = vadd.f32 0.0, %v458
      %v460 = vpop.f32.mrf.mxu0
      %v461 = vadd.f32 0.0, %v460
      %462 = vmatmul.bf16.gmra.mxu0 %v407
      %v463 = vpop.f32.mrf.mxu0
      %v464 = vadd.f32 0.0, %v463
      %v465 = vpop.f32.mrf.mxu0
      %v466 = vadd.f32 0.0, %v465
      %467 = vmatmul.bf16.gmra.mxu0 %v410
      %v468 = vpop.f32.mrf.mxu0
      %v469 = vadd.f32 0.0, %v468
      %v470 = vpop.f32.mrf.mxu0
      %v471 = vadd.f32 0.0, %v470
      %472 = vmatmul.bf16.gmra.mxu0 %v413
      %v473 = vpop.f32.mrf.mxu0
      %v474 = vadd.f32 0.0, %v473
      %v475 = vpop.f32.mrf.mxu0
      %v476 = vadd.f32 0.0, %v475
      %477 = vmatmul.bf16.gmra.mxu0 %v416
      %v478 = vpop.f32.mrf.mxu0
      %v479 = vadd.f32 0.0, %v478
      %v480 = vpop.f32.mrf.mxu0
      %v481 = vadd.f32 0.0, %v480
      %482 = vmatmul.bf16.gmra.mxu0 %v419
      %v483 = vpop.f32.mrf.mxu0
      %v484 = vadd.f32 0.0, %v483
      %v485 = vpop.f32.mrf.mxu0
      %v486 = vadd.f32 0.0, %v485
      %487 = vmatmul.bf16.gmra.mxu0 %v422
      %v488 = vpop.f32.mrf.mxu0
      %v489 = vadd.f32 0.0, %v488
      %v490 = vpop.f32.mrf.mxu0
      %v491 = vadd.f32 0.0, %v490
      %492 = vdwg.mxu0
      %493 = vrot.lane.b32.xlu0 %v434, 11
      %v494 = vpop.permute.xlu0 %493
      %495 = vrot.lane.b32.xlu0 %v436, 11
      %v496 = vpop.permute.xlu0 %495
      %497 = vrot.lane.b32.xlu0 %v439, 11
      %v498 = vpop.permute.xlu0 %497
      %499 = vrot.lane.b32.xlu0 %v441, 11
      %v500 = vpop.permute.xlu0 %499
      %501 = vrot.lane.b32.xlu0 %v444, 11
      %v502 = vpop.permute.xlu0 %501
      %503 = vrot.lane.b32.xlu0 %v446, 11
      %v504 = vpop.permute.xlu0 %503
      %505 = vrot.lane.b32.xlu0 %v449, 11
      %v506 = vpop.permute.xlu0 %505
      %507 = vrot.lane.b32.xlu0 %v451, 11
      %v508 = vpop.permute.xlu0 %507
      %v509 = vadd.f32 %v494, 0.0
      %v510 = vadd.f32 %v496, 0.0
      %v511 = vadd.f32 %v498, 0.0
      %v512 = vadd.f32 %v500, 0.0
      %v513 = vadd.f32 %v502, 0.0
      %v514 = vadd.f32 %v504, 0.0
      %v515 = vadd.f32 %v506, 0.0
      %v516 = vadd.f32 %v508, 0.0
      %517 = vrot.lane.b32.xlu0 %v454, 10
      %v518 = vpop.permute.xlu0 %517
      %519 = vrot.lane.b32.xlu0 %v456, 10
      %v520 = vpop.permute.xlu0 %519
      %521 = vrot.lane.b32.xlu0 %v459, 10
      %v522 = vpop.permute.xlu0 %521
      %523 = vrot.lane.b32.xlu0 %v461, 10
      %v524 = vpop.permute.xlu0 %523
      %525 = vrot.lane.b32.xlu0 %v464, 10
      %v526 = vpop.permute.xlu0 %525
      %527 = vrot.lane.b32.xlu0 %v466, 10
      %v528 = vpop.permute.xlu0 %527
      %529 = vrot.lane.b32.xlu0 %v469, 10
      %v530 = vpop.permute.xlu0 %529
      %531 = vrot.lane.b32.xlu0 %v471, 10
      %v532 = vpop.permute.xlu0 %531
      %v533 = vadd.f32 %v509, %v518
      %v534 = vadd.f32 %v510, %v520
      %v535 = vadd.f32 %v511, %v522
      %v536 = vadd.f32 %v512, %v524
      %v537 = vadd.f32 %v513, %v526
      %v538 = vadd.f32 %v514, %v528
      %v539 = vadd.f32 %v515, %v530
      %v540 = vadd.f32 %v516, %v532
      %541 = vrot.lane.b32.xlu0 %v474, 9
      %v542 = vpop.permute.xlu0 %541
      %543 = vrot.lane.b32.xlu0 %v476, 9
      %v544 = vpop.permute.xlu0 %543
      %545 = vrot.lane.b32.xlu0 %v479, 9
      %v546 = vpop.permute.xlu0 %545
      %547 = vrot.lane.b32.xlu0 %v481, 9
      %v548 = vpop.permute.xlu0 %547
      %549 = vrot.lane.b32.xlu0 %v484, 9
      %v550 = vpop.permute.xlu0 %549
      %551 = vrot.lane.b32.xlu0 %v486, 9
      %v552 = vpop.permute.xlu0 %551
      %553 = vrot.lane.b32.xlu0 %v489, 9
      %v554 = vpop.permute.xlu0 %553
      %555 = vrot.lane.b32.xlu0 %v491, 9
      %v556 = vpop.permute.xlu0 %555
      %v557 = vadd.f32 %v533, %v542
      %v558 = vadd.f32 %v534, %v544
      %v559 = vadd.f32 %v535, %v546
      %v560 = vadd.f32 %v536, %v548
      %v561 = vadd.f32 %v537, %v550
      %v562 = vadd.f32 %v538, %v552
      %v563 = vadd.f32 %v539, %v554
      %v564 = vadd.f32 %v540, %v556
      %v565 = vld [vmem:[%s239 + $0x60] sm:$0xf]
      %v566 = vld [vmem:[%s239 + $0x64] sm:$0xf]
      %v567 = vld [vmem:[%s239 + $0x68] sm:$0xf]
      %v568 = vld [vmem:[%s239 + $0x6c] sm:$0xf]
      %v569 = vld [vmem:[%s239 + $0x70] sm:$0xf]
      %v570 = vld [vmem:[%s239 + $0x74] sm:$0xf]
      %v571 = vld [vmem:[%s239 + $0x78] sm:$0xf]
      %v572 = vld [vmem:[%s239 + $0x7c] sm:$0xf]
      %v573 = vld [vmem:[%s239 + $0x80] sm:$0xf]
      %v574 = vld [vmem:[%s239 + $0x84] sm:$0xf]
      %v575 = vld [vmem:[%s239 + $0x88] sm:$0xf]
      %v576 = vld [vmem:[%s239 + $0x8c] sm:$0xf]
      %v577 = vld [vmem:[%s239 + $0x90] sm:$0xf]
      %v578 = vld [vmem:[%s239 + $0x94] sm:$0xf]
      %v579 = vld [vmem:[%s239 + $0x98] sm:$0xf]
      %v580 = vld [vmem:[%s239 + $0x9c] sm:$0xf]
      %v581 = vld [vmem:[%s239 + $0xa0] sm:$0xf]
      %v582 = vld [vmem:[%s239 + $0xa4] sm:$0xf]
      %v583 = vld [vmem:[%s239 + $0xa8] sm:$0xf]
      %v584 = vld [vmem:[%s239 + $0xac] sm:$0xf]
      %v585 = vld [vmem:[%s239 + $0xb0] sm:$0xf]
      %v586 = vld [vmem:[%s239 + $0xb4] sm:$0xf]
      %v587 = vld [vmem:[%s239 + $0xb8] sm:$0xf]
      %v588 = vld [vmem:[%s239 + $0xbc] sm:$0xf]
      %v613 = vunpack.c.l.b16 %v565
      %v614 = vunpack.c.l.b16 %v566
      %v615 = vunpack.c.l.b16 %v567
      %v616 = vunpack.c.l.b16 %v568
      %v617 = vunpack.c.l.b16 %v569
      %v618 = vunpack.c.l.b16 %v570
      %v619 = vunpack.c.l.b16 %v571
      %v620 = vunpack.c.l.b16 %v572
      %v621 = vunpack.c.l.b16 %v573
      %v622 = vunpack.c.l.b16 %v574
      %v623 = vunpack.c.l.b16 %v575
      %v624 = vunpack.c.l.b16 %v576
      %v625 = vunpack.c.l.b16 %v577
      %v626 = vunpack.c.l.b16 %v578
      %v627 = vunpack.c.l.b16 %v579
      %v628 = vunpack.c.l.b16 %v580
      %v629 = vunpack.c.l.b16 %v581
      %v630 = vunpack.c.l.b16 %v582
      %v631 = vunpack.c.l.b16 %v583
      %v632 = vunpack.c.l.b16 %v584
      %v633 = vunpack.c.l.b16 %v585
      %v634 = vunpack.c.l.b16 %v586
      %v635 = vunpack.c.l.b16 %v587
      %v636 = vunpack.c.l.b16 %v588
      %v637 = vpack.c.b16 %v614, %v613
      %v638 = vpack.c.b16 %v616, %v615
      %v639 = vpack.c.b16 %v618, %v617
      %v640 = vpack.c.b16 %v620, %v619
      %v641 = vpack.c.b16 %v622, %v621
      %v642 = vpack.c.b16 %v624, %v623
      %v643 = vpack.c.b16 %v626, %v625
      %v644 = vpack.c.b16 %v628, %v627
      %v645 = vpack.c.b16 %v630, %v629
      %v646 = vpack.c.b16 %v632, %v631
      %v647 = vpack.c.b16 %v634, %v633
      %v648 = vpack.c.b16 %v636, %v635
      %v650 = vsel %vm387, %v637, 0
      %v653 = vsel %vm387, %v638, 0
      %v656 = vsel %vm387, %v639, 0
      %v659 = vsel %vm387, %v640, 0
      %v662 = vsel %vm387, %v641, 0
      %v665 = vsel %vm387, %v642, 0
      %v668 = vsel %vm387, %v643, 0
      %v671 = vsel %vm387, %v644, 0
      %v674 = vsel %vm387, %v645, 0
      %v677 = vsel %vm387, %v646, 0
      %v680 = vsel %vm387, %v647, 0
      %v683 = vsel %vm387, %v648, 0
      %685 = vmatpush.bf16.msra.mxu0 0
      %686 = vmatpush.bf16.msra.mxu0 0
      %687 = vmatpush.bf16.msra.mxu0 0
      %688 = vmatpush.bf16.msra.mxu0 0
      %689 = vmatpush.bf16.msra.mxu0 %v382
      %690 = vmatpush.bf16.msra.mxu0 %v381
      %691 = vmatpush.bf16.msra.mxu0 %v380
      %692 = vmatpush.bf16.msra.mxu0 %v379
      %693 = vmatmul.bf16.gmra.mxu0 %v650
      %v694 = vpop.f32.mrf.mxu0
      %v695 = vadd.f32 0.0, %v694
      %v696 = vpop.f32.mrf.mxu0
      %v697 = vadd.f32 0.0, %v696
      %698 = vmatmul.bf16.gmra.mxu0 %v653
      %v699 = vpop.f32.mrf.mxu0
      %v700 = vadd.f32 0.0, %v699
      %v701 = vpop.f32.mrf.mxu0
      %v702 = vadd.f32 0.0, %v701
      %703 = vmatmul.bf16.gmra.mxu0 %v656
      %v704 = vpop.f32.mrf.mxu0
      %v705 = vadd.f32 0.0, %v704
      %v706 = vpop.f32.mrf.mxu0
      %v707 = vadd.f32 0.0, %v706
      %708 = vmatmul.bf16.gmra.mxu0 %v659
      %v709 = vpop.f32.mrf.mxu0
      %v710 = vadd.f32 0.0, %v709
      %v711 = vpop.f32.mrf.mxu0
      %v712 = vadd.f32 0.0, %v711
      %713 = vmatmul.bf16.gmra.mxu0 %v662
      %v714 = vpop.f32.mrf.mxu0
      %v715 = vadd.f32 0.0, %v714
      %v716 = vpop.f32.mrf.mxu0
      %v717 = vadd.f32 0.0, %v716
      %718 = vmatmul.bf16.gmra.mxu0 %v665
      %v719 = vpop.f32.mrf.mxu0
      %v720 = vadd.f32 0.0, %v719
      %v721 = vpop.f32.mrf.mxu0
      %v722 = vadd.f32 0.0, %v721
      %723 = vmatmul.bf16.gmra.mxu0 %v668
      %v724 = vpop.f32.mrf.mxu0
      %v725 = vadd.f32 0.0, %v724
      %v726 = vpop.f32.mrf.mxu0
      %v727 = vadd.f32 0.0, %v726
      %728 = vmatmul.bf16.gmra.mxu0 %v671
      %v729 = vpop.f32.mrf.mxu0
      %v730 = vadd.f32 0.0, %v729
      %v731 = vpop.f32.mrf.mxu0
      %v732 = vadd.f32 0.0, %v731
      %733 = vmatmul.bf16.gmra.mxu0 %v674
      %v734 = vpop.f32.mrf.mxu0
      %v735 = vadd.f32 0.0, %v734
      %v736 = vpop.f32.mrf.mxu0
      %v737 = vadd.f32 0.0, %v736
      %738 = vmatmul.bf16.gmra.mxu0 %v677
      %v739 = vpop.f32.mrf.mxu0
      %v740 = vadd.f32 0.0, %v739
      %v741 = vpop.f32.mrf.mxu0
      %v742 = vadd.f32 0.0, %v741
      %743 = vmatmul.bf16.gmra.mxu0 %v680
      %v744 = vpop.f32.mrf.mxu0
      %v745 = vadd.f32 0.0, %v744
      %v746 = vpop.f32.mrf.mxu0
      %v747 = vadd.f32 0.0, %v746
      %748 = vmatmul.bf16.gmra.mxu0 %v683
      %v749 = vpop.f32.mrf.mxu0
      %v750 = vadd.f32 0.0, %v749
      %v751 = vpop.f32.mrf.mxu0
      %v752 = vadd.f32 0.0, %v751
      %753 = vdwg.mxu0
      %754 = vrot.lane.b32.xlu0 %v695, 1
      %v755 = vpop.permute.xlu0 %754
      %756 = vrot.lane.b32.xlu0 %v697, 1
      %v757 = vpop.permute.xlu0 %756
      %758 = vrot.lane.b32.xlu0 %v700, 1
      %v759 = vpop.permute.xlu0 %758
      %760 = vrot.lane.b32.xlu0 %v702, 1
      %v761 = vpop.permute.xlu0 %760
      %762 = vrot.lane.b32.xlu0 %v705, 1
      %v763 = vpop.permute.xlu0 %762
      %764 = vrot.lane.b32.xlu0 %v707, 1
      %v765 = vpop.permute.xlu0 %764
      %766 = vrot.lane.b32.xlu0 %v710, 1
      %v767 = vpop.permute.xlu0 %766
      %768 = vrot.lane.b32.xlu0 %v712, 1
      %v769 = vpop.permute.xlu0 %768
      %v770 = vadd.f32 %v557, %v755
      %v771 = vadd.f32 %v558, %v757
      %v772 = vadd.f32 %v559, %v759
      %v773 = vadd.f32 %v560, %v761
      %v774 = vadd.f32 %v561, %v763
      %v775 = vadd.f32 %v562, %v765
      %v776 = vadd.f32 %v563, %v767
      %v777 = vadd.f32 %v564, %v769
      %v778 = vadd.f32 %v770, %v715
      %v779 = vadd.f32 %v771, %v717
      %v780 = vadd.f32 %v772, %v720
      %v781 = vadd.f32 %v773, %v722
      %v782 = vadd.f32 %v774, %v725
      %v783 = vadd.f32 %v775, %v727
      %v784 = vadd.f32 %v776, %v730
      %v785 = vadd.f32 %v777, %v732
      %786 = vrot.lane.b32.xlu0 %v735, 127
      %v787 = vpop.permute.xlu0 %786
      %788 = vrot.lane.b32.xlu0 %v737, 127
      %v789 = vpop.permute.xlu0 %788
      %790 = vrot.lane.b32.xlu0 %v740, 127
      %v791 = vpop.permute.xlu0 %790
      %792 = vrot.lane.b32.xlu0 %v742, 127
      %v793 = vpop.permute.xlu0 %792
      %794 = vrot.lane.b32.xlu0 %v745, 127
      %v795 = vpop.permute.xlu0 %794
      %796 = vrot.lane.b32.xlu0 %v747, 127
      %v797 = vpop.permute.xlu0 %796
      %798 = vrot.lane.b32.xlu0 %v750, 127
      %v799 = vpop.permute.xlu0 %798
      %800 = vrot.lane.b32.xlu0 %v752, 127
      %v801 = vpop.permute.xlu0 %800
      %v802 = vadd.f32 %v778, %v787
      %v803 = vadd.f32 %v779, %v789
      %v804 = vadd.f32 %v780, %v791
      %v805 = vadd.f32 %v781, %v793
      %v806 = vadd.f32 %v782, %v795
      %v807 = vadd.f32 %v783, %v797
      %v808 = vadd.f32 %v784, %v799
      %v809 = vadd.f32 %v785, %v801
      %v810 = vld [vmem:[%s239 + $0xc0] sm:$0xf]
      %v811 = vld [vmem:[%s239 + $0xc4] sm:$0xf]
      %v812 = vld [vmem:[%s239 + $0xc8] sm:$0xf]
      %v813 = vld [vmem:[%s239 + $0xcc] sm:$0xf]
      %v814 = vld [vmem:[%s239 + $0xd0] sm:$0xf]
      %v815 = vld [vmem:[%s239 + $0xd4] sm:$0xf]
      %v816 = vld [vmem:[%s239 + $0xd8] sm:$0xf]
      %v817 = vld [vmem:[%s239 + $0xdc] sm:$0xf]
      %v818 = vld [vmem:[%s239 + $0xe0] sm:$0xf]
      %v819 = vld [vmem:[%s239 + $0xe4] sm:$0xf]
      %v820 = vld [vmem:[%s239 + $0xe8] sm:$0xf]
      %v821 = vld [vmem:[%s239 + $0xec] sm:$0xf]
      %v822 = vld [vmem:[%s239 + $0xf0] sm:$0xf]
      %v823 = vld [vmem:[%s239 + $0xf4] sm:$0xf]
      %v824 = vld [vmem:[%s239 + $0xf8] sm:$0xf]
      %v825 = vld [vmem:[%s239 + $0xfc] sm:$0xf]
      %v826 = vld [vmem:[%s239 + $0x100] sm:$0xf]
      %v827 = vld [vmem:[%s239 + $0x104] sm:$0xf]
      %v828 = vld [vmem:[%s239 + $0x108] sm:$0xf]
      %v829 = vld [vmem:[%s239 + $0x10c] sm:$0xf]
      %v830 = vld [vmem:[%s239 + $0x110] sm:$0xf]
      %v831 = vld [vmem:[%s239 + $0x114] sm:$0xf]
      %v832 = vld [vmem:[%s239 + $0x118] sm:$0xf]
      %v833 = vld [vmem:[%s239 + $0x11c] sm:$0xf]
      %v858 = vunpack.c.l.b16 %v810
      %v859 = vunpack.c.l.b16 %v811
      %v860 = vunpack.c.l.b16 %v812
      %v861 = vunpack.c.l.b16 %v813
      %v862 = vunpack.c.l.b16 %v814
      %v863 = vunpack.c.l.b16 %v815
      %v864 = vunpack.c.l.b16 %v816
      %v865 = vunpack.c.l.b16 %v817
      %v866 = vunpack.c.l.b16 %v818
      %v867 = vunpack.c.l.b16 %v819
      %v868 = vunpack.c.l.b16 %v820
      %v869 = vunpack.c.l.b16 %v821
      %v870 = vunpack.c.l.b16 %v822
      %v871 = vunpack.c.l.b16 %v823
      %v872 = vunpack.c.l.b16 %v824
      %v873 = vunpack.c.l.b16 %v825
      %v874 = vunpack.c.l.b16 %v826
      %v875 = vunpack.c.l.b16 %v827
      %v876 = vunpack.c.l.b16 %v828
      %v877 = vunpack.c.l.b16 %v829
      %v878 = vunpack.c.l.b16 %v830
      %v879 = vunpack.c.l.b16 %v831
      %v880 = vunpack.c.l.b16 %v832
      %v881 = vunpack.c.l.b16 %v833
      %v882 = vpack.c.b16 %v859, %v858
      %v883 = vpack.c.b16 %v861, %v860
      %v884 = vpack.c.b16 %v863, %v862
      %v885 = vpack.c.b16 %v865, %v864
      %v886 = vpack.c.b16 %v867, %v866
      %v887 = vpack.c.b16 %v869, %v868
      %v888 = vpack.c.b16 %v871, %v870
      %v889 = vpack.c.b16 %v873, %v872
      %v890 = vpack.c.b16 %v875, %v874
      %v891 = vpack.c.b16 %v877, %v876
      %v892 = vpack.c.b16 %v879, %v878
      %v893 = vpack.c.b16 %v881, %v880
      %v895 = vsel %vm387, %v882, 0
      %v898 = vsel %vm387, %v883, 0
      %v901 = vsel %vm387, %v884, 0
      %v904 = vsel %vm387, %v885, 0
      %v907 = vsel %vm387, %v886, 0
      %v910 = vsel %vm387, %v887, 0
      %v913 = vsel %vm387, %v888, 0
      %v916 = vsel %vm387, %v889, 0
      %v919 = vsel %vm387, %v890, 0
      %v922 = vsel %vm387, %v891, 0
      %v925 = vsel %vm387, %v892, 0
      %v928 = vsel %vm387, %v893, 0
      %930 = vmatpush.bf16.msra.mxu0 0
      %931 = vmatpush.bf16.msra.mxu0 0
      %932 = vmatpush.bf16.msra.mxu0 0
      %933 = vmatpush.bf16.msra.mxu0 0
      %934 = vmatpush.bf16.msra.mxu0 %v382
      %935 = vmatpush.bf16.msra.mxu0 %v381
      %936 = vmatpush.bf16.msra.mxu0 %v380
      %937 = vmatpush.bf16.msra.mxu0 %v379
      %938 = vmatmul.bf16.gmra.mxu0 %v895
      %v939 = vpop.f32.mrf.mxu0
      %v940 = vadd.f32 0.0, %v939
      %v941 = vpop.f32.mrf.mxu0
      %v942 = vadd.f32 0.0, %v941
      %943 = vmatmul.bf16.gmra.mxu0 %v898
      %v944 = vpop.f32.mrf.mxu0
      %v945 = vadd.f32 0.0, %v944
      %v946 = vpop.f32.mrf.mxu0
      %v947 = vadd.f32 0.0, %v946
      %948 = vmatmul.bf16.gmra.mxu0 %v901
      %v949 = vpop.f32.mrf.mxu0
      %v950 = vadd.f32 0.0, %v949
      %v951 = vpop.f32.mrf.mxu0
      %v952 = vadd.f32 0.0, %v951
      %953 = vmatmul.bf16.gmra.mxu0 %v904
      %v954 = vpop.f32.mrf.mxu0
      %v955 = vadd.f32 0.0, %v954
      %v956 = vpop.f32.mrf.mxu0
      %v957 = vadd.f32 0.0, %v956
      %958 = vmatmul.bf16.gmra.mxu0 %v907
      %v959 = vpop.f32.mrf.mxu0
      %v960 = vadd.f32 0.0, %v959
      %v961 = vpop.f32.mrf.mxu0
      %v962 = vadd.f32 0.0, %v961
      %963 = vmatmul.bf16.gmra.mxu0 %v910
      %v964 = vpop.f32.mrf.mxu0
      %v965 = vadd.f32 0.0, %v964
      %v966 = vpop.f32.mrf.mxu0
      %v967 = vadd.f32 0.0, %v966
      %968 = vmatmul.bf16.gmra.mxu0 %v913
      %v969 = vpop.f32.mrf.mxu0
      %v970 = vadd.f32 0.0, %v969
      %v971 = vpop.f32.mrf.mxu0
      %v972 = vadd.f32 0.0, %v971
      %973 = vmatmul.bf16.gmra.mxu0 %v916
      %v974 = vpop.f32.mrf.mxu0
      %v975 = vadd.f32 0.0, %v974
      %v976 = vpop.f32.mrf.mxu0
      %v977 = vadd.f32 0.0, %v976
      %978 = vmatmul.bf16.gmra.mxu0 %v919
      %v979 = vpop.f32.mrf.mxu0
      %v980 = vadd.f32 0.0, %v979
      %v981 = vpop.f32.mrf.mxu0
      %v982 = vadd.f32 0.0, %v981
      %983 = vmatmul.bf16.gmra.mxu0 %v922
      %v984 = vpop.f32.mrf.mxu0
      %v985 = vadd.f32 0.0, %v984
      %v986 = vpop.f32.mrf.mxu0
      %v987 = vadd.f32 0.0, %v986
      %988 = vmatmul.bf16.gmra.mxu0 %v925
      %v989 = vpop.f32.mrf.mxu0
      %v990 = vadd.f32 0.0, %v989
      %v991 = vpop.f32.mrf.mxu0
      %v992 = vadd.f32 0.0, %v991
      %993 = vmatmul.bf16.gmra.mxu0 %v928
      %v994 = vpop.f32.mrf.mxu0
      %v995 = vadd.f32 0.0, %v994
      %v996 = vpop.f32.mrf.mxu0
      %v997 = vadd.f32 0.0, %v996
      %998 = vdwg.mxu0
      %999 = vrot.lane.b32.xlu0 %v940, 119
      %v1000 = vpop.permute.xlu0 %999
      %1001 = vrot.lane.b32.xlu0 %v942, 119
      %v1002 = vpop.permute.xlu0 %1001
      %1003 = vrot.lane.b32.xlu0 %v945, 119
      %v1004 = vpop.permute.xlu0 %1003
      %1005 = vrot.lane.b32.xlu0 %v947, 119
      %v1006 = vpop.permute.xlu0 %1005
      %1007 = vrot.lane.b32.xlu0 %v950, 119
      %v1008 = vpop.permute.xlu0 %1007
      %1009 = vrot.lane.b32.xlu0 %v952, 119
      %v1010 = vpop.permute.xlu0 %1009
      %1011 = vrot.lane.b32.xlu0 %v955, 119
      %v1012 = vpop.permute.xlu0 %1011
      %1013 = vrot.lane.b32.xlu0 %v957, 119
      %v1014 = vpop.permute.xlu0 %1013
      %v1015 = vadd.f32 %v802, %v1000
      %v1016 = vadd.f32 %v803, %v1002
      %v1017 = vadd.f32 %v804, %v1004
      %v1018 = vadd.f32 %v805, %v1006
      %v1019 = vadd.f32 %v806, %v1008
      %v1020 = vadd.f32 %v807, %v1010
      %v1021 = vadd.f32 %v808, %v1012
      %v1022 = vadd.f32 %v809, %v1014
      %1023 = vrot.lane.b32.xlu0 %v960, 118
      %v1024 = vpop.permute.xlu0 %1023
      %1025 = vrot.lane.b32.xlu0 %v962, 118
      %v1026 = vpop.permute.xlu0 %1025
      %1027 = vrot.lane.b32.xlu0 %v965, 118
      %v1028 = vpop.permute.xlu0 %1027
      %1029 = vrot.lane.b32.xlu0 %v967, 118
      %v1030 = vpop.permute.xlu0 %1029
      %1031 = vrot.lane.b32.xlu0 %v970, 118
      %v1032 = vpop.permute.xlu0 %1031
      %1033 = vrot.lane.b32.xlu0 %v972, 118
      %v1034 = vpop.permute.xlu0 %1033
      %1035 = vrot.lane.b32.xlu0 %v975, 118
      %v1036 = vpop.permute.xlu0 %1035
      %1037 = vrot.lane.b32.xlu0 %v977, 118
      %v1038 = vpop.permute.xlu0 %1037
      %v1039 = vadd.f32 %v1015, %v1024
      %v1040 = vadd.f32 %v1016, %v1026
      %v1041 = vadd.f32 %v1017, %v1028
      %v1042 = vadd.f32 %v1018, %v1030
      %v1043 = vadd.f32 %v1019, %v1032
      %v1044 = vadd.f32 %v1020, %v1034
      %v1045 = vadd.f32 %v1021, %v1036
      %v1046 = vadd.f32 %v1022, %v1038
      %1047 = vrot.lane.b32.xlu0 %v980, 117
      %v1048 = vpop.permute.xlu0 %1047
      %1049 = vrot.lane.b32.xlu0 %v982, 117
      %v1050 = vpop.permute.xlu0 %1049
      %1051 = vrot.lane.b32.xlu0 %v985, 117
      %v1052 = vpop.permute.xlu0 %1051
      %1053 = vrot.lane.b32.xlu0 %v987, 117
      %v1054 = vpop.permute.xlu0 %1053
      %1055 = vrot.lane.b32.xlu0 %v990, 117
      %v1056 = vpop.permute.xlu0 %1055
      %1057 = vrot.lane.b32.xlu0 %v992, 117
      %v1058 = vpop.permute.xlu0 %1057
      %1059 = vrot.lane.b32.xlu0 %v995, 117
      %v1060 = vpop.permute.xlu0 %1059
      %1061 = vrot.lane.b32.xlu0 %v997, 117
      %v1062 = vpop.permute.xlu0 %1061
      %v1063 = vadd.f32 %v1039, %v1048
      %v1064 = vadd.f32 %v1040, %v1050
      %v1065 = vadd.f32 %v1041, %v1052
      %v1066 = vadd.f32 %v1042, %v1054
      %v1067 = vadd.f32 %v1043, %v1056
      %v1068 = vadd.f32 %v1044, %v1058
      %v1069 = vadd.f32 %v1045, %v1060
      %v1070 = vadd.f32 %v1046, %v1062
      %v1071 = vld [vmem:[%s244] sm:$0xff]
      %v1072 = vld [vmem:[%s244 + $0x8] sm:$0xff]
      %v1073 = vld [vmem:[%s244 + $0x10] sm:$0xff]
      %v1074 = vld [vmem:[%s244 + $0x18] sm:$0xff]
      %v1075 = vld [vmem:[%s244 + $0x20] sm:$0xff]
      %v1076 = vld [vmem:[%s244 + $0x28] sm:$0xff]
      %v1077 = vld [vmem:[%s244 + $0x30] sm:$0xff]
      %v1078 = vld [vmem:[%s244 + $0x38] sm:$0xff]
      %1080 = vset.pattern.permute.xlu0 0
      %1081 = vperm.xlu0 %1080, %v1071
      %v1082 = vpop.permute.xlu0 %1081
      %1085 = vset.pattern.permute.xlu0 0
      %1086 = vperm.xlu0 %1085, %v1072
      %v1087 = vpop.permute.xlu0 %1086
      %1090 = vset.pattern.permute.xlu0 0
      %1091 = vperm.xlu0 %1090, %v1073
      %v1092 = vpop.permute.xlu0 %1091
      %1095 = vset.pattern.permute.xlu0 0
      %1096 = vperm.xlu0 %1095, %v1074
      %v1097 = vpop.permute.xlu0 %1096
      %1100 = vset.pattern.permute.xlu0 0
      %1101 = vperm.xlu0 %1100, %v1075
      %v1102 = vpop.permute.xlu0 %1101
      %1105 = vset.pattern.permute.xlu0 0
      %1106 = vperm.xlu0 %1105, %v1076
      %v1107 = vpop.permute.xlu0 %1106
      %1110 = vset.pattern.permute.xlu0 0
      %1111 = vperm.xlu0 %1110, %v1077
      %v1112 = vpop.permute.xlu0 %1111
      %1115 = vset.pattern.permute.xlu0 0
      %1116 = vperm.xlu0 %1115, %v1078
      %v1117 = vpop.permute.xlu0 %1116
      %v1119 = vadd.f32 %v1063, %v1082
      %v1120 = vadd.f32 %v1064, %v1087
      %v1121 = vadd.f32 %v1065, %v1092
      %v1122 = vadd.f32 %v1066, %v1097
      %v1123 = vadd.f32 %v1067, %v1102
      %v1124 = vadd.f32 %v1068, %v1107
      %v1125 = vadd.f32 %v1069, %v1112
      %v1126 = vadd.f32 %v1070, %v1117
      %p1127 = scmp.lt.s32.totalorder %s20, 14
      // Predicated region
      $region41: #{ffdnet_forward.1} parent=35 // pred_check
        %p1128 = pneg %p1127
      $region42: #{ffdnet_forward.1} parent=35 // pred_check_branch
        %1130 = sbr.rel (%p1128) target = $region44
      $region43: #{ffdnet_forward.1} parent=35 // pred_region
        %v1131 = vmax.f32 %v1119, 0.0
        %v1132 = vmax.f32 %v1120, 0.0
        %v1133 = vmax.f32 %v1121, 0.0
        %v1134 = vmax.f32 %v1122, 0.0
        %v1135 = vmax.f32 %v1123, 0.0
        %v1136 = vmax.f32 %v1124, 0.0
        %v1137 = vmax.f32 %v1125, 0.0
        %v1138 = vmax.f32 %v1126, 0.0
        %v1139 = vld [vmem:[%s3] sm:$0x1]
        %v1141 = vperm.slane %v1139, 0
        %v1143 = vmul.f32 %v1131, %v1141
        %v1144 = vmul.f32 %v1132, %v1141
        %v1145 = vmul.f32 %v1133, %v1141
        %v1146 = vmul.f32 %v1134, %v1141
        %v1147 = vmul.f32 %v1135, %v1141
        %v1148 = vmul.f32 %v1136, %v1141
        %v1149 = vmul.f32 %v1137, %v1141
        %v1150 = vmul.f32 %v1138, %v1141
        %v1151 = vpack.c.bf16 %v1143, %v1143
        %v1152 = vpack.c.bf16 %v1144, %v1144
        %v1153 = vpack.c.bf16 %v1145, %v1145
        %v1154 = vpack.c.bf16 %v1146, %v1146
        %v1155 = vpack.c.bf16 %v1147, %v1147
        %v1156 = vpack.c.bf16 %v1148, %v1148
        %v1157 = vpack.c.bf16 %v1149, %v1149
        %v1158 = vpack.c.bf16 %v1150, %v1150
        %1159 = vst [vmem:[#allocation2] sm:$0xf] %v1151
        %1160 = vst [vmem:[#allocation2 + $0x4] sm:$0xf] %v1152
        %1161 = vst [vmem:[#allocation2 + $0x8] sm:$0xf] %v1153
        %1162 = vst [vmem:[#allocation2 + $0xc] sm:$0xf] %v1154
        %1163 = vst [vmem:[#allocation2 + $0x10] sm:$0xf] %v1155
        %1164 = vst [vmem:[#allocation2 + $0x14] sm:$0xf] %v1156
        %1165 = vst [vmem:[#allocation2 + $0x18] sm:$0xf] %v1157
        %1166 = vst [vmem:[#allocation2 + $0x1c] sm:$0xf] %v1158
      $region44: #{ffdnet_forward.1} parent=35 // pred_fallthru
        _
      %p1167 = scmp.eq.s32.totalorder %s20, 14
      // Predicated region
      $region45: #{ffdnet_forward.1} parent=35 // pred_check
        %p1168 = pneg %p1167
      $region46: #{ffdnet_forward.1} parent=35 // pred_check_branch
        %1170 = sbr.rel (%p1168) target = $region48
      $region47: #{ffdnet_forward.1} parent=35 // pred_region
        %1171 = vst [vmem:[%s249] sm:$0xff] %v1119
        %1172 = vst [vmem:[%s249 + $0x8] sm:$0xff] %v1120
        %1173 = vst [vmem:[%s249 + $0x10] sm:$0xff] %v1121
        %1174 = vst [vmem:[%s249 + $0x18] sm:$0xff] %v1122
        %1175 = vst [vmem:[%s249 + $0x20] sm:$0xff] %v1123
        %1176 = vst [vmem:[%s249 + $0x28] sm:$0xff] %v1124
        %1177 = vst [vmem:[%s249 + $0x30] sm:$0xff] %v1125
        %1178 = vst [vmem:[%s249 + $0x38] sm:$0xff] %v1126
      $region48: #{ffdnet_forward.1} parent=35 // pred_fallthru
        _
      %p1179 = scmp.lt.s32.totalorder %s19, 1
      %s1180 = scalar_select %p1179, %s19, 1
      %s1181 = smul.addr %s1180, 8
      %s1182 = smul.addr %s1181, 8
      %s1183 = scalar_lea.vmem %s4, %s1182
      // Predicated region
      $region49: #{ffdnet_forward.1} parent=35 // pred_check
        %p1184 = pneg %p144
      $region50: #{ffdnet_forward.1} parent=35 // pred_check_branch
        %1186 = sbr.rel (%p1184) target = $region52
      $region51: #{ffdnet_forward.1} parent=35 // pred_region
        _
      $region52: #{ffdnet_forward.1} parent=35 // pred_fallthru
        _
    $region36: #{ffdnet_forward.1} parent=5 // pred_fallthru
      _
    %p1187 = scmp.le.s32.totalorder 2, %s10
    // Predicated region
    $region53: #{ffdnet_forward.1} parent=5 // pred_check
      %p1188 = pneg %p1187
    $region54: #{ffdnet_forward.1} parent=5 // pred_check_branch
      %1190 = sbr.rel (%p1188) target = $region56
    $region55: #{ffdnet_forward.1} parent=5 // pred_region
      %s1191 = ssub.s32 %s10, 2
      // Predicated region
      $region57: #{ffdnet_forward.1} parent=55 // pred_check
        %p1192 = pneg %p150
      $region58: #{ffdnet_forward.1} parent=55 // pred_check_branch
        %1194 = sbr.rel (%p1192) target = $region60
      $region59: #{ffdnet_forward.1} parent=55 // pred_region
        %p1195 = scmp.lt.s32.totalorder %s21, 1
        %s1196 = scalar_select %p1195, %s21, 1
        %s1197 = smul.addr %s1196, 8
        %s1198 = smul.addr %s1197, 8
        %s1199 = scalar_lea.vmem %s4, %s1198
      $region60: #{ffdnet_forward.1} parent=55 // pred_fallthru
        _
    $region56: #{ffdnet_forward.1} parent=5 // pred_fallthru
      _
  $region6: #{ffdnet_forward.1} parent=0 // loop_footer
    %s14 = sadd.s32 1, %s10
  $region7: #{ffdnet_forward.1} parent=0 // loop_footer_branch
    %9 = sbr.rel target = $region3
  $region8: #{ffdnet_forward.1} parent=0 // loop_exit
    _

</llo_original>
